<compile_context>
chip_gen: v5e
topology: v5e:2x2
jax: 0.10.0
libtpu: 0.0.40
codegen_flags: <defaults>
</compile_context>

<pallas_src>
import functools

import jax
import jax.numpy as jnp
from jax import lax
from jax.experimental import pallas as pl
from jax.experimental.pallas import tpu as pltpu


# ----------------------------------------------------------------------------
# Tiled linear projection kernels:  out = x @ W (+ b)
# ----------------------------------------------------------------------------
def _linear_kernel(x_ref, w_ref, o_ref):
    o_ref[...] = jnp.dot(
        x_ref[...], w_ref[...], preferred_element_type=jnp.float32
    ).astype(o_ref.dtype)


def _linear_bias_kernel(x_ref, w_ref, b_ref, o_ref):
    o_ref[...] = (
        jnp.dot(x_ref[...], w_ref[...], preferred_element_type=jnp.float32)
        + b_ref[...]
    ).astype(o_ref.dtype)


def pallas_linear(x2d, w, b=None, *, tm=256, tn=256):
    """Tiled (M, N) matmul, K kept whole; both grid axes are 'parallel'.

    tm/tn default to 256 to fill the v6e/v7x 256x256 MXU (use tn=128 on v5e).
    Small dims take the full-array escape hatch.
    """
    n, din = x2d.shape
    dout = w.shape[1]
    TM = n if n <= tm else tm
    TN = dout if dout <= tn else tn
    grid = (pl.cdiv(n, TM), pl.cdiv(dout, TN))
    x_spec = pl.BlockSpec((TM, din), lambda i, j: (i, 0))
    w_spec = pl.BlockSpec((din, TN), lambda i, j: (0, j))
    o_spec = pl.BlockSpec((TM, TN), lambda i, j: (i, j))
    out_shape = jax.ShapeDtypeStruct((n, dout), jnp.float32)
    cp = pltpu.CompilerParams(dimension_semantics=("parallel", "parallel"))
    if b is None:
        return pl.pallas_call(
            _linear_kernel, out_shape=out_shape, grid=grid,
            in_specs=[x_spec, w_spec], out_specs=o_spec, compiler_params=cp,
        )(x2d, w)
    b_spec = pl.BlockSpec((1, TN), lambda i, j: (0, j))
    return pl.pallas_call(
        _linear_bias_kernel, out_shape=out_shape, grid=grid,
        in_specs=[x_spec, w_spec, b_spec], out_specs=o_spec, compiler_params=cp,
    )(x2d, w, b.reshape(1, dout))


# ----------------------------------------------------------------------------
# Chunked delta-rule recurrence.
#
# Per head, with W0 the fast-weight carry at chunk start:
#   U     = K W0^T                                    (Tc, d)   MXU
#   S     = strictly_lower(K K^T)                     (Tc, Tc)  MXU
#   Delta solves  Delta_i = lr_i*(v_i - U_i) - lr_i*(S[i,:] @ Delta)
#         (forward substitution; per-dim lr forbids the scalar WY inverse)
#   O     = Q W0^T + lower_incl(Q K^T) @ Delta        (Tc, d)   MXU
#   W_end = W0 + Delta^T K                            (d, d)    MXU
# ----------------------------------------------------------------------------
def _wm_chunk_kernel(y_ref, o_ref, w_ref, s_scr, b_scr, g_scr, dlt_scr, *, H):
    Tc, D4 = y_ref.shape
    D = D4 // 4
    d = D // H

    @pl.when(pl.program_id(1) == 0)
    def _():
        w_ref[...] = jnp.zeros_like(w_ref)

    for h in range(H):
        lo = h * d
        qh = y_ref[:, lo:lo + d]                                   # (Tc, d)
        kh = y_ref[:, D + lo:D + lo + d]
        vh = y_ref[:, 2 * D + lo:2 * D + lo + d]
        lh = jax.nn.sigmoid(y_ref[:, 3 * D + lo:3 * D + lo + d])   # slab sigmoid (EUP)

        # F.normalize(dim=-1): x / max(||x||, 1e-12), whole-slab rsqrt (EUP).
        kh = kh * lax.rsqrt(jnp.maximum(jnp.sum(kh * kh, -1, keepdims=True), 1e-24))
        vh = vh * lax.rsqrt(jnp.maximum(jnp.sum(vh * vh, -1, keepdims=True), 1e-24))

        w0 = w_ref[h]                                              # (d, d) carry

        # u[i] = W0 k_i ;  a[i, j] = k_i . k_j   (dense MXU matmuls)
        u = lax.dot_general(kh, w0, (((1,), (1,)), ((), ())),
                            preferred_element_type=jnp.float32)    # (Tc, d)
        a = lax.dot_general(kh, kh, (((1,), (1,)), ((), ())),
                            preferred_element_type=jnp.float32)    # (Tc, Tc)

        row = lax.broadcasted_iota(jnp.int32, (Tc, Tc), 0)
        col = lax.broadcasted_iota(jnp.int32, (Tc, Tc), 1)
        s_scr[...] = jnp.where(col < row, a, 0.0)
        b_scr[...] = lh * (vh - u)
        g_scr[...] = lh
        dlt_scr[...] = jnp.zeros_like(dlt_scr)

        def _solve_row(i, carry):
            corr = jnp.dot(s_scr[pl.ds(i, 1), :], dlt_scr[...],
                           preferred_element_type=jnp.float32)     # (1, d)
            dlt_scr[pl.ds(i, 1), :] = (
                b_scr[pl.ds(i, 1), :] - g_scr[pl.ds(i, 1), :] * corr)
            return carry

        if Tc <= 32:
            # Short static trip count: fully unrolled straight-line code.
            for i in range(Tc):
                _solve_row(i, 0)
        else:
            # TODO(synk): sub-block the substitution (r-row blocks + one dense
            # correction matmul per block) to shorten the serial chain.
            lax.fori_loop(0, Tc, _solve_row, 0)

        delta = dlt_scr[...]                                       # (Tc, d)

        qk = lax.dot_general(qh, kh, (((1,), (1,)), ((), ())),
                             preferred_element_type=jnp.float32)   # (Tc, Tc)
        out_h = (
            lax.dot_general(qh, w0, (((1,), (1,)), ((), ())),
                            preferred_element_type=jnp.float32)
            + jnp.dot(jnp.where(col <= row, qk, 0.0), delta,
                      preferred_element_type=jnp.float32)
        )
        o_ref[:, lo:lo + d] = out_h.astype(o_ref.dtype)            # (Tc, d) slab store

        # carry:  W_end = W0 + Delta^T K
        w_ref[h] = w0 + lax.dot_general(delta, kh, (((0,), (0,)), ((), ())),
                                        preferred_element_type=jnp.float32)


def _pick_chunk(T, pref=256):
    """Largest T-chunk <= pref that divides T and is sublane (8) aligned.

    pref=256 fills the v6e/v7x MXU; pass pref=128 on v5e.
    """
    if T <= pref:
        return T
    for tc in range(pref, 7, -8):
        if T % tc == 0:
            return tc
    return T  # TODO(synk): mask a ragged last chunk instead of whole-T fallback


def working_memory_scan(y, D, H, Tc=None):
    """y: (B, T, 4D) fused [q|k|v|lr_pre] activations -> (B, T, D) memory output."""
    B, T, D4 = y.shape
    assert D4 == 4 * D and D % H == 0
    d = D // H
    if Tc is None:
        Tc = _pick_chunk(T)

    return pl.pallas_call(
        functools.partial(_wm_chunk_kernel, H=H),
        out_shape=jax.ShapeDtypeStruct((B, T, D), jnp.float32),
        grid=(B, T // Tc),
        in_specs=[pl.BlockSpec((None, Tc, 4 * D), lambda b, c: (b, c, 0))],
        out_specs=pl.BlockSpec((None, Tc, D), lambda b, c: (b, c, 0)),
        scratch_shapes=[
            pltpu.VMEM((H, d, d), jnp.float32),   # per-head fast-weight carry
            pltpu.VMEM((Tc, Tc), jnp.float32),    # strictly-lower K K^T
            pltpu.VMEM((Tc, d), jnp.float32),     # b = lr * (v - K W0^T)
            pltpu.VMEM((Tc, d), jnp.float32),     # lr slab
            pltpu.VMEM((Tc, d), jnp.float32),     # delta
        ],
        compiler_params=pltpu.CompilerParams(
            dimension_semantics=("parallel", "arbitrary")),
    )(y)


# ----------------------------------------------------------------------------
# Module wrapper
# ----------------------------------------------------------------------------
def init_params(key, hidden_size):
    D = hidden_size
    keys = jax.random.split(key, 5)
    s = 1.0 / jnp.sqrt(D)
    u = lambda k: jax.random.uniform(k, (D, D), jnp.float32, -s, s)
    return {
        "Wq": u(keys[0]),
        "Wk": u(keys[1]),
        "Wv": u(keys[2]),
        "Wlr": u(keys[3]),
        "b_lr": jnp.zeros((D,), jnp.float32),  # nn.init.constant_(bias, 0)
        "Wout": u(keys[4]),
    }


def fast_working_memory_forward(params, x, wm_head):
    B, T, D = x.shape
    H = wm_head

    # Fused q|k|v|lr projection: x is read from HBM once, one wide MXU matmul.
    w_fused = jnp.concatenate(
        [params["Wq"], params["Wk"], params["Wv"], params["Wlr"]], axis=1)   # (D, 4D)
    b_fused = jnp.concatenate(
        [jnp.zeros((3 * D,), jnp.float32), params["b_lr"]])                  # (4D,)

    y = pallas_linear(x.reshape(B * T, D), w_fused, b_fused)                 # (B*T, 4D)
    o = working_memory_scan(y.reshape(B, T, 4 * D), D, H)                    # (B, T, D)
    out = pallas_linear(o.reshape(B * T, D), params["Wout"])                 # (B*T, D)
    return out.reshape(B, T, D)


# ----------------------------------------------------------------------------
# Pure-JAX reference (same assumed mem_update_fwd semantics) for validation
# ----------------------------------------------------------------------------
def reference_forward(params, x, wm_head):
    B, T, D = x.shape
    H, d = wm_head, D // wm_head
    q = x @ params["Wq"]
    k = x @ params["Wk"]
    v = x @ params["Wv"]
    lr = jax.nn.sigmoid(x @ params["Wlr"] + params["b_lr"])

    def nrm(a):
        return a / jnp.maximum(jnp.linalg.norm(a, axis=-1, keepdims=True), 1e-12)

    qh = q.reshape(B, T, H, d)
    kh = nrm(k.reshape(B, T, H, d))
    vh = nrm(v.reshape(B, T, H, d))
    lrh = lr.reshape(B, T, H, d)

    w = jnp.zeros((B, H, d, d), jnp.float32)
    outs = []
    for t in range(T):
        kt, vt, qt, lt = kh[:, t], vh[:, t], qh[:, t], lrh[:, t]
        vhat = jnp.einsum("bhij,bhj->bhi", w, kt)
        delta = lt * (vt - vhat)
        w = w + jnp.einsum("bhi,bhj->bhij", delta, kt)
        outs.append(jnp.einsum("bhij,bhj->bhi", w, qt))
    o = jnp.stack(outs, axis=1).reshape(B, T, D)
    return o @ params["Wout"]


if __name__ == "__main__":
    B, T, D, H = 2, 8, 32, 4
    key = jax.random.PRNGKey(0)
    pkey, xkey = jax.random.split(key)
    params = init_params(pkey, D)
    x = jax.random.normal(xkey, (B, T, D), jnp.float32)

    out = jax.block_until_ready(fast_working_memory_forward(params, x, H))
    ref = jax.block_until_ready(reference_forward(params, x, H))

    assert out.shape == (B, T, D)
    assert jnp.allclose(out, ref, rtol=1e-4, atol=1e-4), "mismatch vs reference"

    print("KERNEL_OK")
</pallas_src>

<mosaic_0001>
module attributes {stable_mosaic.version = 11 : i64} {
  func.func @_linear_bias_kernel(%arg0: i32, %arg1: i32, %arg2: memref<16x32xf32, #tpu.memory_space<vmem>>, %arg3: memref<32x128xf32, #tpu.memory_space<vmem>>, %arg4: memref<1x128xf32, #tpu.memory_space<vmem>>, %arg5: memref<16x128xf32, #tpu.memory_space<vmem>>) attributes {dimension_semantics = [#tpu.dimension_semantics<parallel>, #tpu.dimension_semantics<parallel>], iteration_bounds = array<i64: 1, 1>, scalar_prefetch = 0 : i64, scratch_operands = 0 : i64, tpu.core_type = #tpu.core_type<tc>, window_params = [{transform_indices = @transform_0, window_bounds = array<i64: 16, 32>}, {transform_indices = @transform_1, window_bounds = array<i64: 32, 128>}, {transform_indices = @transform_2, window_bounds = array<i64: 1, 128>}, {transform_indices = @transform_3, window_bounds = array<i64: 16, 128>}]} {
    %c0 = arith.constant 0 : index
    %c0_0 = arith.constant 0 : index
    %0 = vector.load %arg2[%c0, %c0_0] : memref<16x32xf32, #tpu.memory_space<vmem>>, vector<16x32xf32>
    %c0_1 = arith.constant 0 : index
    %c0_2 = arith.constant 0 : index
    %1 = vector.load %arg3[%c0_1, %c0_2] : memref<32x128xf32, #tpu.memory_space<vmem>>, vector<32x128xf32>
    %cst = arith.constant dense<0.000000e+00> : vector<16x128xf32>
    %2 = tpu.matmul %0, %1, %cst {dimension_numbers = #tpu.dot_dimension_numbers<[1], [0], [0], [1], [0, 0, 1, 1], [], []>} : vector<16x32xf32>, vector<32x128xf32>, vector<16x128xf32> -> vector<16x128xf32>
    %c0_3 = arith.constant 0 : index
    %c0_4 = arith.constant 0 : index
    %3 = vector.load %arg4[%c0_3, %c0_4] : memref<1x128xf32, #tpu.memory_space<vmem>>, vector<1x128xf32>
    %4 = vector.broadcast %3 : vector<1x128xf32> to vector<16x128xf32>
    %5 = arith.addf %2, %4 : vector<16x128xf32>
    %c0_5 = arith.constant 0 : index
    %c0_6 = arith.constant 0 : index
    %6 = vector.load %arg5[%c0_5, %c0_6] : memref<16x128xf32, #tpu.memory_space<vmem>>, vector<16x128xf32>
    tpu.vector_store %arg5[%c0_5, %c0_6], %5 {strides = array<i32>} : memref<16x128xf32, #tpu.memory_space<vmem>>, vector<16x128xf32>,
    return
  }
  func.func @transform_0(%arg0: i32, %arg1: i32) -> (i32, i32) {
    %c0_i32 = arith.constant 0 : i32
    %c0_i32_0 = arith.constant 0 : i32
    return %arg0, %c0_i32 : i32, i32
  }
  func.func @transform_1(%arg0: i32, %arg1: i32) -> (i32, i32) {
    %c0_i32 = arith.constant 0 : i32
    %c0_i32_0 = arith.constant 0 : i32
    return %c0_i32, %arg1 : i32, i32
  }
  func.func @transform_2(%arg0: i32, %arg1: i32) -> (i32, i32) {
    %c0_i32 = arith.constant 0 : i32
    %c0_i32_0 = arith.constant 0 : i32
    return %c0_i32, %arg1 : i32, i32
  }
  func.func @transform_3(%arg0: i32, %arg1: i32) -> (i32, i32) {
    %c0_i32 = arith.constant 0 : i32
    return %arg0, %arg1 : i32, i32
  }
}

</mosaic_0001>

<llo_original>
// kernel: tpu_custom_call.1
$region0: #{tpu_custom_call.1}
  #allocation0 [shape = 'u32[]', space=smem, size = 0x4, offset = 0x4, fixed_abs, tag = 'smem constant byte address 0x4 - core index']
  #allocation1 [shape = 'u32[72,128]{1,0:T(1,128)}', space=vmem, size = 0x9000, scoped, tag = 'internal scratch']
  %s0 = inlined_call_operand.hbm [shape: f32[16,32], index: 0, kind: input, shape index: {}]
  %s1 = inlined_call_operand.hbm [shape: f32[32,128], index: 1, kind: input, shape index: {}]
  %s2 = inlined_call_operand.vmem [shape: f32[1,128], index: 2, kind: input, shape index: {}]
  %s3 = inlined_call_operand.hbm [shape: f32[16,128], index: 3, kind: output, shape index: {}]
  %s4 = sld [smem:[#allocation0]]
  $region30: #{tpu_custom_call.1} parent=0
    _
  %s6 = ssub.s32 1, %s4
  %s7 = scalar_select 0, %s6, %s4
  $region1: #{tpu_custom_call.1} parent=0
    #allocation2 [shape = 'u8[8192]{0}', space=vmem, size = 0x2000, scoped, tag = 'input window, operand 0, single buffered']
    #allocation3 [shape = 's32[1]{0}', space=sflag, size = 0x4, scoped, tag = 'scoped memory for tpu_custom_call.1']
    #allocation4 [shape = 's32[1]{0}', space=sflag, size = 0x4, scoped, tag = 'scoped memory for tpu_custom_call.1']
    #allocation5 [shape = 'u8[16384]{0}', space=vmem, size = 0x4000, scoped, tag = 'input window, operand 1, single buffered']
    #allocation6 [shape = 's32[1]{0}', space=sflag, size = 0x4, scoped, tag = 'scoped memory for tpu_custom_call.1']
    #allocation7 [shape = 'u8[8192]{0}', space=vmem, size = 0x2000, scoped, tag = 'output window, operand 0, single buffered']
    %8 = vsyncpa [#allocation3], 0
    %9 = vsyncpa [#allocation6], 0
    %10 = vsyncpa [#allocation4], 0
    // Predicated region
    $region2: #{tpu_custom_call.1} parent=1 // pred_check
      _
    $region3: #{tpu_custom_call.1} parent=1 // pred_check_branch
      %12 = sbr.rel (0) target = $region5
    $region4: #{tpu_custom_call.1} parent=1 // pred_region
      %14 = vsyncadd [#allocation3], 0
      %s15 = sshll.u32 %s0, 4
      %s16 = int_to_ptr.hbm [resolvable:$true] %s15
      %s17 = sshll.u32 [#allocation2], 4
      %s18 = int_to_ptr.vmem [resolvable:$true] %s17
      %23 = dma.hbm_to_vmem [thread:$0]  %s16, 256, %s18, [#allocation3], 128, 128, 8
    $region5: #{tpu_custom_call.1} parent=1 // pred_fallthru
      _
    // Predicated region
    $region6: #{tpu_custom_call.1} parent=1 // pred_check
      _
    $region7: #{tpu_custom_call.1} parent=1 // pred_check_branch
      %25 = sbr.rel (0) target = $region9
    $region8: #{tpu_custom_call.1} parent=1 // pred_region
      %27 = vsyncadd [#allocation6], 0
      %s28 = sshll.u32 %s1, 4
      %s29 = int_to_ptr.hbm [resolvable:$true] %s28
      %s30 = sshll.u32 [#allocation5], 4
      %s31 = int_to_ptr.vmem [resolvable:$true] %s30
      %36 = dma.hbm_to_vmem [thread:$0]  %s29, 512, %s31, [#allocation6], 128, 128, 8
    $region9: #{tpu_custom_call.1} parent=1 // pred_fallthru
      _
    // Predicated region
    $region10: #{tpu_custom_call.1} parent=1 // pred_check
      _
    $region11: #{tpu_custom_call.1} parent=1 // pred_check_branch
      %38 = sbr.rel (0) target = $region13
    $region12: #{tpu_custom_call.1} parent=1 // pred_region
      _
    $region13: #{tpu_custom_call.1} parent=1 // pred_fallthru
      _
    // Predicated region
    $region14: #{tpu_custom_call.1} parent=1 // pred_check
      _
    $region15: #{tpu_custom_call.1} parent=1 // pred_check_branch
      %40 = sbr.rel (0) target = $region17
    $region16: #{tpu_custom_call.1} parent=1 // pred_region
      %42 = dma.done [#allocation3], 256
    $region17: #{tpu_custom_call.1} parent=1 // pred_fallthru
      _
    // Predicated region
    $region18: #{tpu_custom_call.1} parent=1 // pred_check
      _
    $region19: #{tpu_custom_call.1} parent=1 // pred_check_branch
      %44 = sbr.rel (0) target = $region21
    $region20: #{tpu_custom_call.1} parent=1 // pred_region
      %46 = dma.done [#allocation6], 512
    $region21: #{tpu_custom_call.1} parent=1 // pred_fallthru
      _
    %v47 = vld [vmem:[#allocation2] sm:$0xff]
    %v48 = vld [vmem:[#allocation2 + $0x8] sm:$0xff]
    %v49 = vld [vmem:[#allocation5] sm:$0xff]
    %v50 = vld [vmem:[#allocation5 + $0x8] sm:$0xff]
    %v51 = vld [vmem:[#allocation5 + $0x10] sm:$0xff]
    %v52 = vld [vmem:[#allocation5 + $0x18] sm:$0xff]
    %v53 = vld [vmem:[%s2] sm:$0x1]
    %v55 = vperm.slane %v53, 0
    %vm57 = vcmask 261120
    %v59 = vsel %vm57, %v47, 0
    %v62 = vsel %vm57, %v48, 0
    %64 = vmatpush.msra.mxu0 0.0
    %65 = vmatpush.msra.mxu0 0.0
    %66 = vmatpush.msra.mxu0 0.0
    %67 = vmatpush.msra.mxu0 0.0
    %68 = vmatpush.msra.mxu0 0.0
    %69 = vmatpush.msra.mxu0 0.0
    %70 = vmatpush.msra.mxu0 0.0
    %71 = vmatpush.msra.mxu0 0.0
    %72 = vmatpush.msra.mxu0 0.0
    %73 = vmatpush.msra.mxu0 0.0
    %74 = vmatpush.msra.mxu0 0.0
    %75 = vmatpush.msra.mxu0 0.0
    %76 = vmatpush.msra.mxu0 %v52
    %77 = vmatpush.msra.mxu0 %v51
    %78 = vmatpush.msra.mxu0 %v50
    %79 = vmatpush.msra.mxu0 %v49
    %80 = vmatmul.f32.gmra.mxu0 %v59
    %v81 = vpop.f32.mrf.mxu0
    %v82 = vadd.f32 %v55, %v81
    %83 = vmatmul.f32.gmra.mxu0 %v62
    %v84 = vpop.f32.mrf.mxu0
    %v85 = vadd.f32 %v55, %v84
    %86 = vdwg.mxu0
    %87 = vst [vmem:[#allocation7] sm:$0xff] %v82
    %88 = vst [vmem:[#allocation7 + $0x8] sm:$0xff] %v85
    // Predicated region
    $region22: #{tpu_custom_call.1} parent=1 // pred_check
      _
    $region23: #{tpu_custom_call.1} parent=1 // pred_check_branch
      %90 = sbr.rel (0) target = $region25
    $region24: #{tpu_custom_call.1} parent=1 // pred_region
      %92 = vsyncadd [#allocation4], 0
      %s93 = sshll.u32 [#allocation7], 4
      %s94 = int_to_ptr.vmem [resolvable:$true] %s93
      %s95 = sshll.u32 %s3, 4
      %s96 = int_to_ptr.hbm [resolvable:$true] %s95
      %101 = dma.vmem_to_hbm [thread:$0]  %s94, 256, %s96, [#allocation4], 128, 128, 8
    $region25: #{tpu_custom_call.1} parent=1 // pred_fallthru
      _
    // Predicated region
    $region26: #{tpu_custom_call.1} parent=1 // pred_check
      _
    $region27: #{tpu_custom_call.1} parent=1 // pred_check_branch
      %103 = sbr.rel (0) target = $region29
    $region28: #{tpu_custom_call.1} parent=1 // pred_region
      %105 = dma.done [#allocation4], 256
    $region29: #{tpu_custom_call.1} parent=1 // pred_fallthru
      _
    %106 = vsyncpa [#allocation3], 1
    %107 = vsyncpa [#allocation6], 1
    %108 = vsyncpa [#allocation4], 1

</llo_original>
